<compile_context>
chip_gen: v6e
topology: v6e:2x2x1
jax: 0.10.0
libtpu: 0.0.40
codegen_flags: <defaults>
</compile_context>

<pallas_src>
import jax
import jax.numpy as jnp
from jax.experimental import pallas as pl
from jax.experimental.pallas import tpu as pltpu


# ----------------------------------------------------------------------------
# Kernel
# ----------------------------------------------------------------------------
def _affine_kernel(x_ref, o_ref):
    # Bit-exact with the PyTorch module: ((x + 2) * 3) - 1.
    # Extra VALU op vs. the fused 3*x+5 form is free — the kernel is HBM-bound.
    o_ref[...] = (x_ref[...] + 2) * 3 - 1


# ----------------------------------------------------------------------------
# Tiling heuristics
# ----------------------------------------------------------------------------
_TARGET_TILE_BYTES = 4 * 1024 * 1024     # ~4 MiB per buffer
_MIN_GRID_STEPS = 4                      # keep both v7x TensorCores busy
_SMALL_INPUT_BYTES = 256 * 1024          # below this, skip Pallas entirely


def _sublane_multiple(itemsize: int) -> int:
    # f32 -> 8, bf16/f16 -> 16, int8/fp8 -> 32
    return {1: 32, 2: 16}.get(itemsize, 8)


def _pick_lanes(total: int):
    """Largest 128-multiple lane width that exactly divides `total` (no pad)."""
    for lanes in (2048, 1024, 512, 256, 128):
        if total % lanes == 0:
            return lanes
    return None


def _pick_tile_rows(rows: int, lanes: int, itemsize: int) -> int:
    sublane = _sublane_multiple(itemsize)
    if rows <= sublane:
        # Block equal to the full (small) row extent is always a legal layout.
        return rows
    # ~4 MiB per buffer target.
    target = max(sublane, _TARGET_TILE_BYTES // (lanes * itemsize))
    # Keep at least ~_MIN_GRID_STEPS steps so the "parallel" grid axis can be
    # sharded across v7x's two TensorCores.
    cap = max(sublane, -(-rows // _MIN_GRID_STEPS))
    tile = min(target, cap, rows)
    return max(sublane, (tile // sublane) * sublane)


def _run_slab(x2d: jax.Array, tile_r: int, total: int, itemsize: int) -> jax.Array:
    rows, lanes = x2d.shape
    grid = (pl.cdiv(rows, tile_r),)
    return pl.pallas_call(
        _affine_kernel,
        out_shape=jax.ShapeDtypeStruct(x2d.shape, x2d.dtype),
        grid=grid,
        in_specs=[pl.BlockSpec((tile_r, lanes), lambda i: (i, 0))],
        out_specs=pl.BlockSpec((tile_r, lanes), lambda i: (i, 0)),
        compiler_params=pltpu.CompilerParams(
            # Shards row-tiles across both TensorCores on v7x; harmless on
            # single-TC v5e/v6e.
            dimension_semantics=("parallel",),
            # ~16 MiB of double-buffered tiles + headroom; explicit because
            # v5e's scoped default is only 16 MiB, and 32 MiB stays safely
            # under v7x's 64 MiB physical VMEM.
            vmem_limit_bytes=32 * 1024 * 1024,
        ),
        cost_estimate=pl.CostEstimate(
            flops=3 * total,
            transcendentals=0,
            bytes_accessed=2 * total * itemsize,
        ),
    )(x2d)


# ----------------------------------------------------------------------------
# Public forward
# ----------------------------------------------------------------------------
def pt_module_forward(x: jax.Array) -> jax.Array:
    """Pallas implementation of PtModule.forward: (x + 2) * 3 - 1 elementwise."""
    orig_shape = x.shape
    total = x.size
    itemsize = jnp.dtype(x.dtype).itemsize

    # Tiny tensors: pallas_call launch + wrapper reshapes dominate — let XLA
    # fuse the elementwise expression instead.
    if total * itemsize < _SMALL_INPUT_BYTES:
        return (x + 2) * 3 - 1

    lanes = _pick_lanes(total)
    if lanes is not None:
        # Fast path: zero-copy reshape to a lane-dense slab, no padding,
        # no trailing slice — the only HBM traffic is the kernel's own R+W.
        rows = total // lanes
        x2d = x.reshape(rows, lanes)
        tile_r = _pick_tile_rows(rows, lanes, itemsize)
        out2d = _run_slab(x2d, tile_r, total, itemsize)
        return out2d.reshape(orig_shape)

    # Fallback (numel has no 128-multiple divisor): pad the flat vector by
    # < 128 elements to the next lane multiple.  The pad/slice copies are the
    # unavoidable cost of an awkward size.
    lanes = 128
    pad = (-total) % lanes
    flat = jnp.pad(x.reshape(-1), (0, pad))
    rows = (total + pad) // lanes
    x2d = flat.reshape(rows, lanes)
    tile_r = _pick_tile_rows(rows, lanes, itemsize)
    out2d = _run_slab(x2d, tile_r, total, itemsize)
    return out2d.reshape(-1)[:total].reshape(orig_shape)


# ----------------------------------------------------------------------------
# Self-test
# ----------------------------------------------------------------------------
if __name__ == "__main__":
    key = jax.random.PRNGKey(0)
    k1, k2 = jax.random.split(key)

    # Small NCHW input consistent with the module's forward — exercises the
    # XLA-fused small-input bypass.
    x_small = jax.random.normal(k1, (2, 4, 16, 16), dtype=jnp.float32)
    y_small = jax.block_until_ready(pt_module_forward(x_small))
    ref_small = (x_small + 2) * 3 - 1
    assert y_small.shape == x_small.shape and y_small.dtype == x_small.dtype
    assert jnp.allclose(y_small, ref_small, atol=1e-6, rtol=1e-6)

    # Moderately sized input (1 MiB f32) — exercises the Pallas kernel path:
    # zero-pad-free lane-dense slab (128, 2048), 4-step "parallel" grid,
    # double-buffered DMA.
    x_big = jax.random.normal(k2, (4, 8, 64, 128), dtype=jnp.float32)
    y_big = jax.block_until_ready(pt_module_forward(x_big))
    ref_big = (x_big + 2) * 3 - 1
    assert y_big.shape == x_big.shape and y_big.dtype == x_big.dtype
    assert jnp.allclose(y_big, ref_big, atol=1e-6, rtol=1e-6)

    print("KERNEL_OK")
</pallas_src>

<mosaic_0001>
module attributes {stable_mosaic.version = 11 : i64} {
  func.func @_affine_kernel(%arg0: i32, %arg1: memref<32x2048xf32, #tpu.memory_space<vmem>>, %arg2: memref<32x2048xf32, #tpu.memory_space<vmem>>) attributes {dimension_semantics = [#tpu.dimension_semantics<parallel>], iteration_bounds = array<i64: 4>, scalar_prefetch = 0 : i64, scratch_operands = 0 : i64, tpu.core_type = #tpu.core_type<tc>, window_params = [{transform_indices = @transform_0, window_bounds = array<i64: 32, 2048>}, {transform_indices = @transform_1, window_bounds = array<i64: 32, 2048>}]} {
    %c0 = arith.constant 0 : index
    %c0_0 = arith.constant 0 : index
    %0 = vector.load %arg1[%c0, %c0_0] : memref<32x2048xf32, #tpu.memory_space<vmem>>, vector<32x2048xf32>
    %cst = arith.constant 2.000000e+00 : f32
    %1 = vector.broadcast %cst : f32 to vector<32x2048xf32>
    %2 = arith.addf %0, %1 : vector<32x2048xf32>
    %cst_1 = arith.constant 3.000000e+00 : f32
    %3 = vector.broadcast %cst_1 : f32 to vector<32x2048xf32>
    %4 = arith.mulf %2, %3 : vector<32x2048xf32>
    %cst_2 = arith.constant 1.000000e+00 : f32
    %5 = vector.broadcast %cst_2 : f32 to vector<32x2048xf32>
    %6 = arith.subf %4, %5 : vector<32x2048xf32>
    %c0_3 = arith.constant 0 : index
    %c0_4 = arith.constant 0 : index
    %7 = vector.load %arg2[%c0_3, %c0_4] : memref<32x2048xf32, #tpu.memory_space<vmem>>, vector<32x2048xf32>
    tpu.vector_store %arg2[%c0_3, %c0_4], %6 {strides = array<i32>} : memref<32x2048xf32, #tpu.memory_space<vmem>>, vector<32x2048xf32>,
    return
  }
  func.func @transform_0(%arg0: i32) -> (i32, i32) {
    %c0_i32 = arith.constant 0 : i32
    %c0_i32_0 = arith.constant 0 : i32
    return %arg0, %c0_i32 : i32, i32
  }
  func.func @transform_1(%arg0: i32) -> (i32, i32) {
    %c0_i32 = arith.constant 0 : i32
    %c0_i32_0 = arith.constant 0 : i32
    return %arg0, %c0_i32 : i32, i32
  }
}

</mosaic_0001>

<llo_original>
// kernel: tpu_custom_call.1
$region0: #{tpu_custom_call.1}
  #allocation0 [shape = 'u32[]', space=smem, size = 0x4, offset = 0x4, fixed_abs, tag = 'smem constant byte address 0x4 - core index']
  #allocation1 [shape = 'u32[144,128]{1,0:T(1,128)}', space=vmem, size = 0x12000, scoped, tag = 'internal scratch']
  %s0 = inlined_call_operand.hbm [shape: f32[128,2048], index: 0, kind: input, shape index: {}]
  %s1 = inlined_call_operand.hbm [shape: f32[128,2048], index: 1, kind: output, shape index: {}]
  %s2 = sld [smem:[#allocation0]]
  $region41: #{tpu_custom_call.1} parent=0
    _
  %s4 = ssub.s32 1, %s2
  %s5 = scalar_select 0, %s4, %s2
  $region1: #{tpu_custom_call.1} parent=0
    #allocation2 [shape = 'u8[524288]{0}', space=vmem, size = 0x80000, scoped, tag = 'input window, operand 0']
    #allocation3 [shape = 's32[2]{0}', space=sflag, size = 0x8, scoped, tag = 'scoped memory for tpu_custom_call.1']
    #allocation4 [shape = 's32[2]{0}', space=sflag, size = 0x8, scoped, tag = 'scoped memory for tpu_custom_call.1']
    #allocation5 [shape = 'u8[524288]{0}', space=vmem, size = 0x80000, scoped, tag = 'output window, operand 0']
    %6 = vsyncpa [#allocation3], 0
    %s7 = scalar_lea.sflag [#allocation3], 1
    %8 = vsyncpa %s7, 0
    %9 = vsyncpa [#allocation4], 0
    %s10 = scalar_lea.sflag [#allocation4], 1
    %11 = vsyncpa %s10, 0
    loop: start=0, step=1, limit=6
    $region2: #{tpu_custom_call.1} parent=1 // loop_pre_header
      _
    $region3: #{tpu_custom_call.1} parent=1 // loop_header
      %s13 = sphi 0, %s17
      %p14 = scmp.ge.s32.totalorder %s13, 6
      %s23 = sphi 0, %s25
      %s26 = sphi 0, %s23
      %s27 = sphi 0, %s26
      %s43 = sphi 0, %s27
      %s49 = sphi 0, %s51
      %s52 = sphi 0, %s49
      %s53 = sphi 0, %s52
      %s69 = sphi 0, %s53
    $region4: #{tpu_custom_call.1} parent=1 // loop_header_branch
      %16 = sbr.rel (%p14) target = $region8
    $region5: #{tpu_custom_call.1} parent=1 // loop_body
      %s18 = ssub.s32 %s13, 1
      %s19 = ssub.s32 %s13, 2
      %s20 = sadd.s32 %s13, 1
      %s21 = ssub.s32 %s13, %s20
      %p22 = scmp.eq.s32.totalorder %s21, 0
      %s24 = sadd.s32 %s23, 1
      %s25 = scalar_select %p22, %s23, %s24
      %p28 = pneg %p22
      %p29 = scmp.eq.s32.totalorder %s13, 3
      %p30 = por %p28, %p29
      %p31 = scmp.ne.s32.totalorder %s23, %s26
      %p32 = scmp.eq.s32.totalorder %s13, 0
      %p33 = por %p31, %p32
      %p34 = scmp.ne.s32.totalorder %s23, %s26
      %p35 = scmp.eq.s32.totalorder %s18, 3
      %p36 = por %p34, %p35
      %p37 = scmp.ne.s32.totalorder %s26, %s27
      %p38 = scmp.eq.s32.totalorder %s18, 0
      %p39 = por %p37, %p38
      %p40 = scmp.ne.s32.totalorder %s26, %s27
      %p41 = scmp.eq.s32.totalorder %s19, 3
      %p42 = por %p40, %p41
      %p44 = scmp.ne.s32.totalorder %s27, %s43
      %p45 = scmp.eq.s32.totalorder %s19, 0
      %p46 = por %p44, %p45
      %s47 = ssub.s32 %s13, %s20
      %p48 = scmp.eq.s32.totalorder %s47, 0
      %s50 = sadd.s32 %s49, 1
      %s51 = scalar_select %p48, %s49, %s50
      %p54 = pneg %p48
      %p55 = scmp.eq.s32.totalorder %s13, 3
      %p56 = por %p54, %p55
      %p57 = scmp.ne.s32.totalorder %s49, %s52
      %p58 = scmp.eq.s32.totalorder %s13, 0
      %p59 = por %p57, %p58
      %p60 = scmp.ne.s32.totalorder %s49, %s52
      %p61 = scmp.eq.s32.totalorder %s18, 3
      %p62 = por %p60, %p61
      %p63 = scmp.ne.s32.totalorder %s52, %s53
      %p64 = scmp.eq.s32.totalorder %s18, 0
      %p65 = por %p63, %p64
      %p66 = scmp.ne.s32.totalorder %s52, %s53
      %p67 = scmp.eq.s32.totalorder %s19, 3
      %p68 = por %p66, %p67
      %p70 = scmp.ne.s32.totalorder %s53, %s69
      %p71 = scmp.eq.s32.totalorder %s19, 0
      %p72 = por %p70, %p71
      %p73 = scmp.le.s32.totalorder 1, %s13
      %p74 = scmp.lt.s32.totalorder %s13, 5
      %p75 = pnand %p73, %p74
      %p76 = pneg %p75
      // Predicated region
      $region9: #{tpu_custom_call.1} parent=5 // pred_check
        _
      $region10: #{tpu_custom_call.1} parent=5 // pred_check_branch
        %78 = sbr.rel (%p75) target = $region12
      $region11: #{tpu_custom_call.1} parent=5 // pred_region
        %s79 = ssub.s32 %s13, 1
      $region12: #{tpu_custom_call.1} parent=5 // pred_fallthru
        _
      %p80 = scmp.lt.s32.totalorder %s13, 4
      // Predicated region
      $region13: #{tpu_custom_call.1} parent=5 // pred_check
        %p81 = pneg %p80
      $region14: #{tpu_custom_call.1} parent=5 // pred_check_branch
        %83 = sbr.rel (%p81) target = $region16
      $region15: #{tpu_custom_call.1} parent=5 // pred_region
        // Predicated region
        $region17: #{tpu_custom_call.1} parent=15 // pred_check
          %p84 = pneg %p33
        $region18: #{tpu_custom_call.1} parent=15 // pred_check_branch
          %86 = sbr.rel (%p84) target = $region20
        $region19: #{tpu_custom_call.1} parent=15 // pred_region
          %s87 = sand.u32 %s23, 1
          %s88 = scalar_lea.sflag [#allocation3], %s87
          %s89 = sand.u32 %s23, 1
          %s90 = smul.addr %s89, 512
          %s91 = scalar_lea.vmem [#allocation2], %s90
          %s92 = smul.u32 4, %s13
          %s94 = ssub.s32 8192, 8192
          %95 = vsyncadd %s88, %s94
          %s96 = smul.addr %s92, 16
          %s97 = smul.addr %s96, 128
          %s98 = scalar_lea.hbm %s0, %s97
          %s99 = sshll.u32 %s91, 4
          %s100 = int_to_ptr.vmem [resolvable:$true] %s99
          %105 = dma.hbm_to_vmem [thread:$0]  %s98, 8192, %s100, %s88, 2048, 2048, 128
        $region20: #{tpu_custom_call.1} parent=15 // pred_fallthru
          _
      $region16: #{tpu_custom_call.1} parent=5 // pred_fallthru
        _
      %p106 = scmp.le.s32.totalorder 1, %s13
      %p107 = scmp.lt.s32.totalorder %s13, 5
      %p108 = pnand %p106, %p107
      %p109 = pneg %p108
      // Predicated region
      $region21: #{tpu_custom_call.1} parent=5 // pred_check
        _
      $region22: #{tpu_custom_call.1} parent=5 // pred_check_branch
        %111 = sbr.rel (%p108) target = $region24
      $region23: #{tpu_custom_call.1} parent=5 // pred_region
        %s112 = ssub.s32 %s13, 1
        %s113 = sand.u32 %s26, 1
        %s114 = scalar_lea.sflag [#allocation3], %s113
        %s115 = sand.u32 %s26, 1
        %s116 = smul.addr %s115, 512
        %s117 = scalar_lea.vmem [#allocation2], %s116
        // Predicated region
        $region25: #{tpu_custom_call.1} parent=23 // pred_check
          %p118 = pneg %p39
        $region26: #{tpu_custom_call.1} parent=23 // pred_check_branch
          %120 = sbr.rel (%p118) target = $region28
        $region27: #{tpu_custom_call.1} parent=23 // pred_region
          %121 = dma.done %s114, 8192
        $region28: #{tpu_custom_call.1} parent=23 // pred_fallthru
          _
        %s122 = sand.u32 %s26, 1
        %s123 = scalar_lea.sflag [#allocation3], %s122
        %s124 = sand.u32 %s26, 1
        %s125 = smul.addr %s124, 512
        %s126 = scalar_lea.vmem [#allocation2], %s125
        %p127 = pneg %p39
        %p128 = pneg %p36
        %p129 = pneg %p65
        %p130 = pneg %p62
        %s131 = sand.u32 %s52, 1
        %s132 = scalar_lea.sflag [#allocation4], %s131
        %s133 = sand.u32 %s52, 1
        %s134 = smul.addr %s133, 512
        %s135 = scalar_lea.vmem [#allocation5], %s134
        %s136 = smul.u32 4, %s18
        %s137 = smul.u32 4, %s18
        %v138 = vld [vmem:[%s117] sm:$0xff]
        %v139 = vld [vmem:[%s117 + $0x8] sm:$0xff]
        %v140 = vld [vmem:[%s117 + $0x10] sm:$0xff]
        %v141 = vld [vmem:[%s117 + $0x18] sm:$0xff]
        %v142 = vld [vmem:[%s117 + $0x20] sm:$0xff]
        %v143 = vld [vmem:[%s117 + $0x28] sm:$0xff]
        %v144 = vld [vmem:[%s117 + $0x30] sm:$0xff]
        %v145 = vld [vmem:[%s117 + $0x38] sm:$0xff]
        %v146 = vld [vmem:[%s117 + $0x40] sm:$0xff]
        %v147 = vld [vmem:[%s117 + $0x48] sm:$0xff]
        %v148 = vld [vmem:[%s117 + $0x50] sm:$0xff]
        %v149 = vld [vmem:[%s117 + $0x58] sm:$0xff]
        %v150 = vld [vmem:[%s117 + $0x60] sm:$0xff]
        %v151 = vld [vmem:[%s117 + $0x68] sm:$0xff]
        %v152 = vld [vmem:[%s117 + $0x70] sm:$0xff]
        %v153 = vld [vmem:[%s117 + $0x78] sm:$0xff]
        %v154 = vld [vmem:[%s117 + $0x80] sm:$0xff]
        %v155 = vld [vmem:[%s117 + $0x88] sm:$0xff]
        %v156 = vld [vmem:[%s117 + $0x90] sm:$0xff]
        %v157 = vld [vmem:[%s117 + $0x98] sm:$0xff]
        %v158 = vld [vmem:[%s117 + $0xa0] sm:$0xff]
        %v159 = vld [vmem:[%s117 + $0xa8] sm:$0xff]
        %v160 = vld [vmem:[%s117 + $0xb0] sm:$0xff]
        %v161 = vld [vmem:[%s117 + $0xb8] sm:$0xff]
        %v162 = vld [vmem:[%s117 + $0xc0] sm:$0xff]
        %v163 = vld [vmem:[%s117 + $0xc8] sm:$0xff]
        %v164 = vld [vmem:[%s117 + $0xd0] sm:$0xff]
        %v165 = vld [vmem:[%s117 + $0xd8] sm:$0xff]
        %v166 = vld [vmem:[%s117 + $0xe0] sm:$0xff]
        %v167 = vld [vmem:[%s117 + $0xe8] sm:$0xff]
        %v168 = vld [vmem:[%s117 + $0xf0] sm:$0xff]
        %v169 = vld [vmem:[%s117 + $0xf8] sm:$0xff]
        %v170 = vld [vmem:[%s117 + $0x100] sm:$0xff]
        %v171 = vld [vmem:[%s117 + $0x108] sm:$0xff]
        %v172 = vld [vmem:[%s117 + $0x110] sm:$0xff]
        %v173 = vld [vmem:[%s117 + $0x118] sm:$0xff]
        %v174 = vld [vmem:[%s117 + $0x120] sm:$0xff]
        %v175 = vld [vmem:[%s117 + $0x128] sm:$0xff]
        %v176 = vld [vmem:[%s117 + $0x130] sm:$0xff]
        %v177 = vld [vmem:[%s117 + $0x138] sm:$0xff]
        %v178 = vld [vmem:[%s117 + $0x140] sm:$0xff]
        %v179 = vld [vmem:[%s117 + $0x148] sm:$0xff]
        %v180 = vld [vmem:[%s117 + $0x150] sm:$0xff]
        %v181 = vld [vmem:[%s117 + $0x158] sm:$0xff]
        %v182 = vld [vmem:[%s117 + $0x160] sm:$0xff]
        %v183 = vld [vmem:[%s117 + $0x168] sm:$0xff]
        %v184 = vld [vmem:[%s117 + $0x170] sm:$0xff]
        %v185 = vld [vmem:[%s117 + $0x178] sm:$0xff]
        %v186 = vld [vmem:[%s117 + $0x180] sm:$0xff]
        %v187 = vld [vmem:[%s117 + $0x188] sm:$0xff]
        %v188 = vld [vmem:[%s117 + $0x190] sm:$0xff]
        %v189 = vld [vmem:[%s117 + $0x198] sm:$0xff]
        %v190 = vld [vmem:[%s117 + $0x1a0] sm:$0xff]
        %v191 = vld [vmem:[%s117 + $0x1a8] sm:$0xff]
        %v192 = vld [vmem:[%s117 + $0x1b0] sm:$0xff]
        %v193 = vld [vmem:[%s117 + $0x1b8] sm:$0xff]
        %v194 = vld [vmem:[%s117 + $0x1c0] sm:$0xff]
        %v195 = vld [vmem:[%s117 + $0x1c8] sm:$0xff]
        %v196 = vld [vmem:[%s117 + $0x1d0] sm:$0xff]
        %v197 = vld [vmem:[%s117 + $0x1d8] sm:$0xff]
        %v198 = vld [vmem:[%s117 + $0x1e0] sm:$0xff]
        %v199 = vld [vmem:[%s117 + $0x1e8] sm:$0xff]
        %v200 = vld [vmem:[%s117 + $0x1f0] sm:$0xff]
        %v201 = vld [vmem:[%s117 + $0x1f8] sm:$0xff]
        %v202 = vadd.f32 %v138, 2.0
        %v203 = vadd.f32 %v139, 2.0
        %v204 = vadd.f32 %v140, 2.0
        %v205 = vadd.f32 %v141, 2.0
        %v206 = vadd.f32 %v142, 2.0
        %v207 = vadd.f32 %v143, 2.0
        %v208 = vadd.f32 %v144, 2.0
        %v209 = vadd.f32 %v145, 2.0
        %v210 = vadd.f32 %v146, 2.0
        %v211 = vadd.f32 %v147, 2.0
        %v212 = vadd.f32 %v148, 2.0
        %v213 = vadd.f32 %v149, 2.0
        %v214 = vadd.f32 %v150, 2.0
        %v215 = vadd.f32 %v151, 2.0
        %v216 = vadd.f32 %v152, 2.0
        %v217 = vadd.f32 %v153, 2.0
        %v218 = vadd.f32 %v154, 2.0
        %v219 = vadd.f32 %v155, 2.0
        %v220 = vadd.f32 %v156, 2.0
        %v221 = vadd.f32 %v157, 2.0
        %v222 = vadd.f32 %v158, 2.0
        %v223 = vadd.f32 %v159, 2.0
        %v224 = vadd.f32 %v160, 2.0
        %v225 = vadd.f32 %v161, 2.0
        %v226 = vadd.f32 %v162, 2.0
        %v227 = vadd.f32 %v163, 2.0
        %v228 = vadd.f32 %v164, 2.0
        %v229 = vadd.f32 %v165, 2.0
        %v230 = vadd.f32 %v166, 2.0
        %v231 = vadd.f32 %v167, 2.0
        %v232 = vadd.f32 %v168, 2.0
        %v233 = vadd.f32 %v169, 2.0
        %v234 = vadd.f32 %v170, 2.0
        %v235 = vadd.f32 %v171, 2.0
        %v236 = vadd.f32 %v172, 2.0
        %v237 = vadd.f32 %v173, 2.0
        %v238 = vadd.f32 %v174, 2.0
        %v239 = vadd.f32 %v175, 2.0
        %v240 = vadd.f32 %v176, 2.0
        %v241 = vadd.f32 %v177, 2.0
        %v242 = vadd.f32 %v178, 2.0
        %v243 = vadd.f32 %v179, 2.0
        %v244 = vadd.f32 %v180, 2.0
        %v245 = vadd.f32 %v181, 2.0
        %v246 = vadd.f32 %v182, 2.0
        %v247 = vadd.f32 %v183, 2.0
        %v248 = vadd.f32 %v184, 2.0
        %v249 = vadd.f32 %v185, 2.0
        %v250 = vadd.f32 %v186, 2.0
        %v251 = vadd.f32 %v187, 2.0
        %v252 = vadd.f32 %v188, 2.0
        %v253 = vadd.f32 %v189, 2.0
        %v254 = vadd.f32 %v190, 2.0
        %v255 = vadd.f32 %v191, 2.0
        %v256 = vadd.f32 %v192, 2.0
        %v257 = vadd.f32 %v193, 2.0
        %v258 = vadd.f32 %v194, 2.0
        %v259 = vadd.f32 %v195, 2.0
        %v260 = vadd.f32 %v196, 2.0
        %v261 = vadd.f32 %v197, 2.0
        %v262 = vadd.f32 %v198, 2.0
        %v263 = vadd.f32 %v199, 2.0
        %v264 = vadd.f32 %v200, 2.0
        %v265 = vadd.f32 %v201, 2.0
        %v266 = vmul.f32 %v202, 3.0
        %v267 = vmul.f32 %v203, 3.0
        %v268 = vmul.f32 %v204, 3.0
        %v269 = vmul.f32 %v205, 3.0
        %v270 = vmul.f32 %v206, 3.0
        %v271 = vmul.f32 %v207, 3.0
        %v272 = vmul.f32 %v208, 3.0
        %v273 = vmul.f32 %v209, 3.0
        %v274 = vmul.f32 %v210, 3.0
        %v275 = vmul.f32 %v211, 3.0
        %v276 = vmul.f32 %v212, 3.0
        %v277 = vmul.f32 %v213, 3.0
        %v278 = vmul.f32 %v214, 3.0
        %v279 = vmul.f32 %v215, 3.0
        %v280 = vmul.f32 %v216, 3.0
        %v281 = vmul.f32 %v217, 3.0
        %v282 = vmul.f32 %v218, 3.0
        %v283 = vmul.f32 %v219, 3.0
        %v284 = vmul.f32 %v220, 3.0
        %v285 = vmul.f32 %v221, 3.0
        %v286 = vmul.f32 %v222, 3.0
        %v287 = vmul.f32 %v223, 3.0
        %v288 = vmul.f32 %v224, 3.0
        %v289 = vmul.f32 %v225, 3.0
        %v290 = vmul.f32 %v226, 3.0
        %v291 = vmul.f32 %v227, 3.0
        %v292 = vmul.f32 %v228, 3.0
        %v293 = vmul.f32 %v229, 3.0
        %v294 = vmul.f32 %v230, 3.0
        %v295 = vmul.f32 %v231, 3.0
        %v296 = vmul.f32 %v232, 3.0
        %v297 = vmul.f32 %v233, 3.0
        %v298 = vmul.f32 %v234, 3.0
        %v299 = vmul.f32 %v235, 3.0
        %v300 = vmul.f32 %v236, 3.0
        %v301 = vmul.f32 %v237, 3.0
        %v302 = vmul.f32 %v238, 3.0
        %v303 = vmul.f32 %v239, 3.0
        %v304 = vmul.f32 %v240, 3.0
        %v305 = vmul.f32 %v241, 3.0
        %v306 = vmul.f32 %v242, 3.0
        %v307 = vmul.f32 %v243, 3.0
        %v308 = vmul.f32 %v244, 3.0
        %v309 = vmul.f32 %v245, 3.0
        %v310 = vmul.f32 %v246, 3.0
        %v311 = vmul.f32 %v247, 3.0
        %v312 = vmul.f32 %v248, 3.0
        %v313 = vmul.f32 %v249, 3.0
        %v314 = vmul.f32 %v250, 3.0
        %v315 = vmul.f32 %v251, 3.0
        %v316 = vmul.f32 %v252, 3.0
        %v317 = vmul.f32 %v253, 3.0
        %v318 = vmul.f32 %v254, 3.0
        %v319 = vmul.f32 %v255, 3.0
        %v320 = vmul.f32 %v256, 3.0
        %v321 = vmul.f32 %v257, 3.0
        %v322 = vmul.f32 %v258, 3.0
        %v323 = vmul.f32 %v259, 3.0
        %v324 = vmul.f32 %v260, 3.0
        %v325 = vmul.f32 %v261, 3.0
        %v326 = vmul.f32 %v262, 3.0
        %v327 = vmul.f32 %v263, 3.0
        %v328 = vmul.f32 %v264, 3.0
        %v329 = vmul.f32 %v265, 3.0
        %v330 = vsub.f32 %v266, 1.0
        %v331 = vsub.f32 %v267, 1.0
        %v332 = vsub.f32 %v268, 1.0
        %v333 = vsub.f32 %v269, 1.0
        %v334 = vsub.f32 %v270, 1.0
        %v335 = vsub.f32 %v271, 1.0
        %v336 = vsub.f32 %v272, 1.0
        %v337 = vsub.f32 %v273, 1.0
        %v338 = vsub.f32 %v274, 1.0
        %v339 = vsub.f32 %v275, 1.0
        %v340 = vsub.f32 %v276, 1.0
        %v341 = vsub.f32 %v277, 1.0
        %v342 = vsub.f32 %v278, 1.0
        %v343 = vsub.f32 %v279, 1.0
        %v344 = vsub.f32 %v280, 1.0
        %v345 = vsub.f32 %v281, 1.0
        %v346 = vsub.f32 %v282, 1.0
        %v347 = vsub.f32 %v283, 1.0
        %v348 = vsub.f32 %v284, 1.0
        %v349 = vsub.f32 %v285, 1.0
        %v350 = vsub.f32 %v286, 1.0
        %v351 = vsub.f32 %v287, 1.0
        %v352 = vsub.f32 %v288, 1.0
        %v353 = vsub.f32 %v289, 1.0
        %v354 = vsub.f32 %v290, 1.0
        %v355 = vsub.f32 %v291, 1.0
        %v356 = vsub.f32 %v292, 1.0
        %v357 = vsub.f32 %v293, 1.0
        %v358 = vsub.f32 %v294, 1.0
        %v359 = vsub.f32 %v295, 1.0
        %v360 = vsub.f32 %v296, 1.0
        %v361 = vsub.f32 %v297, 1.0
        %v362 = vsub.f32 %v298, 1.0
        %v363 = vsub.f32 %v299, 1.0
        %v364 = vsub.f32 %v300, 1.0
        %v365 = vsub.f32 %v301, 1.0
        %v366 = vsub.f32 %v302, 1.0
        %v367 = vsub.f32 %v303, 1.0
        %v368 = vsub.f32 %v304, 1.0
        %v369 = vsub.f32 %v305, 1.0
        %v370 = vsub.f32 %v306, 1.0
        %v371 = vsub.f32 %v307, 1.0
        %v372 = vsub.f32 %v308, 1.0
        %v373 = vsub.f32 %v309, 1.0
        %v374 = vsub.f32 %v310, 1.0
        %v375 = vsub.f32 %v311, 1.0
        %v376 = vsub.f32 %v312, 1.0
        %v377 = vsub.f32 %v313, 1.0
        %v378 = vsub.f32 %v314, 1.0
        %v379 = vsub.f32 %v315, 1.0
        %v380 = vsub.f32 %v316, 1.0
        %v381 = vsub.f32 %v317, 1.0
        %v382 = vsub.f32 %v318, 1.0
        %v383 = vsub.f32 %v319, 1.0
        %v384 = vsub.f32 %v320, 1.0
        %v385 = vsub.f32 %v321, 1.0
        %v386 = vsub.f32 %v322, 1.0
        %v387 = vsub.f32 %v323, 1.0
        %v388 = vsub.f32 %v324, 1.0
        %v389 = vsub.f32 %v325, 1.0
        %v390 = vsub.f32 %v326, 1.0
        %v391 = vsub.f32 %v327, 1.0
        %v392 = vsub.f32 %v328, 1.0
        %v393 = vsub.f32 %v329, 1.0
        %394 = vst [vmem:[%s135] sm:$0xff] %v330
        %395 = vst [vmem:[%s135 + $0x8] sm:$0xff] %v331
        %396 = vst [vmem:[%s135 + $0x10] sm:$0xff] %v332
        %397 = vst [vmem:[%s135 + $0x18] sm:$0xff] %v333
        %398 = vst [vmem:[%s135 + $0x20] sm:$0xff] %v334
        %399 = vst [vmem:[%s135 + $0x28] sm:$0xff] %v335
        %400 = vst [vmem:[%s135 + $0x30] sm:$0xff] %v336
        %401 = vst [vmem:[%s135 + $0x38] sm:$0xff] %v337
        %402 = vst [vmem:[%s135 + $0x40] sm:$0xff] %v338
        %403 = vst [vmem:[%s135 + $0x48] sm:$0xff] %v339
        %404 = vst [vmem:[%s135 + $0x50] sm:$0xff] %v340
        %405 = vst [vmem:[%s135 + $0x58] sm:$0xff] %v341
        %406 = vst [vmem:[%s135 + $0x60] sm:$0xff] %v342
        %407 = vst [vmem:[%s135 + $0x68] sm:$0xff] %v343
        %408 = vst [vmem:[%s135 + $0x70] sm:$0xff] %v344
        %409 = vst [vmem:[%s135 + $0x78] sm:$0xff] %v345
        %410 = vst [vmem:[%s135 + $0x80] sm:$0xff] %v346
        %411 = vst [vmem:[%s135 + $0x88] sm:$0xff] %v347
        %412 = vst [vmem:[%s135 + $0x90] sm:$0xff] %v348
        %413 = vst [vmem:[%s135 + $0x98] sm:$0xff] %v349
        %414 = vst [vmem:[%s135 + $0xa0] sm:$0xff] %v350
        %415 = vst [vmem:[%s135 + $0xa8] sm:$0xff] %v351
        %416 = vst [vmem:[%s135 + $0xb0] sm:$0xff] %v352
        %417 = vst [vmem:[%s135 + $0xb8] sm:$0xff] %v353
        %418 = vst [vmem:[%s135 + $0xc0] sm:$0xff] %v354
        %419 = vst [vmem:[%s135 + $0xc8] sm:$0xff] %v355
        %420 = vst [vmem:[%s135 + $0xd0] sm:$0xff] %v356
        %421 = vst [vmem:[%s135 + $0xd8] sm:$0xff] %v357
        %422 = vst [vmem:[%s135 + $0xe0] sm:$0xff] %v358
        %423 = vst [vmem:[%s135 + $0xe8] sm:$0xff] %v359
        %424 = vst [vmem:[%s135 + $0xf0] sm:$0xff] %v360
        %425 = vst [vmem:[%s135 + $0xf8] sm:$0xff] %v361
        %426 = vst [vmem:[%s135 + $0x100] sm:$0xff] %v362
        %427 = vst [vmem:[%s135 + $0x108] sm:$0xff] %v363
        %428 = vst [vmem:[%s135 + $0x110] sm:$0xff] %v364
        %429 = vst [vmem:[%s135 + $0x118] sm:$0xff] %v365
        %430 = vst [vmem:[%s135 + $0x120] sm:$0xff] %v366
        %431 = vst [vmem:[%s135 + $0x128] sm:$0xff] %v367
        %432 = vst [vmem:[%s135 + $0x130] sm:$0xff] %v368
        %433 = vst [vmem:[%s135 + $0x138] sm:$0xff] %v369
        %434 = vst [vmem:[%s135 + $0x140] sm:$0xff] %v370
        %435 = vst [vmem:[%s135 + $0x148] sm:$0xff] %v371
        %436 = vst [vmem:[%s135 + $0x150] sm:$0xff] %v372
        %437 = vst [vmem:[%s135 + $0x158] sm:$0xff] %v373
        %438 = vst [vmem:[%s135 + $0x160] sm:$0xff] %v374
        %439 = vst [vmem:[%s135 + $0x168] sm:$0xff] %v375
        %440 = vst [vmem:[%s135 + $0x170] sm:$0xff] %v376
        %441 = vst [vmem:[%s135 + $0x178] sm:$0xff] %v377
        %442 = vst [vmem:[%s135 + $0x180] sm:$0xff] %v378
        %443 = vst [vmem:[%s135 + $0x188] sm:$0xff] %v379
        %444 = vst [vmem:[%s135 + $0x190] sm:$0xff] %v380
        %445 = vst [vmem:[%s135 + $0x198] sm:$0xff] %v381
        %446 = vst [vmem:[%s135 + $0x1a0] sm:$0xff] %v382
        %447 = vst [vmem:[%s135 + $0x1a8] sm:$0xff] %v383
        %448 = vst [vmem:[%s135 + $0x1b0] sm:$0xff] %v384
        %449 = vst [vmem:[%s135 + $0x1b8] sm:$0xff] %v385
        %450 = vst [vmem:[%s135 + $0x1c0] sm:$0xff] %v386
        %451 = vst [vmem:[%s135 + $0x1c8] sm:$0xff] %v387
        %452 = vst [vmem:[%s135 + $0x1d0] sm:$0xff] %v388
        %453 = vst [vmem:[%s135 + $0x1d8] sm:$0xff] %v389
        %454 = vst [vmem:[%s135 + $0x1e0] sm:$0xff] %v390
        %455 = vst [vmem:[%s135 + $0x1e8] sm:$0xff] %v391
        %456 = vst [vmem:[%s135 + $0x1f0] sm:$0xff] %v392
        %457 = vst [vmem:[%s135 + $0x1f8] sm:$0xff] %v393
        %s458 = sand.u32 %s52, 1
        %s459 = scalar_lea.sflag [#allocation4], %s458
        %s460 = sand.u32 %s52, 1
        %s461 = smul.addr %s460, 512
        %s462 = scalar_lea.vmem [#allocation5], %s461
        // Predicated region
        $region29: #{tpu_custom_call.1} parent=23 // pred_check
          %p463 = pneg %p62
        $region30: #{tpu_custom_call.1} parent=23 // pred_check_branch
          %465 = sbr.rel (%p463) target = $region32
        $region31: #{tpu_custom_call.1} parent=23 // pred_region
          %s466 = smul.u32 4, %s18
          %s468 = ssub.s32 8192, 8192
          %469 = vsyncadd %s459, %s468
          %s470 = smul.addr %s466, 16
          %s471 = smul.addr %s470, 128
          %s472 = scalar_lea.hbm %s1, %s471
          %s473 = sshll.u32 %s462, 4
          %s474 = int_to_ptr.vmem [resolvable:$true] %s473
          %479 = dma.vmem_to_hbm [thread:$0]  %s474, 8192, %s472, %s459, 2048, 2048, 128
        $region32: #{tpu_custom_call.1} parent=23 // pred_fallthru
          _
      $region24: #{tpu_custom_call.1} parent=5 // pred_fallthru
        _
      %p480 = scmp.le.s32.totalorder 2, %s13
      // Predicated region
      $region33: #{tpu_custom_call.1} parent=5 // pred_check
        %p481 = pneg %p480
      $region34: #{tpu_custom_call.1} parent=5 // pred_check_branch
        %483 = sbr.rel (%p481) target = $region36
      $region35: #{tpu_custom_call.1} parent=5 // pred_region
        %s484 = ssub.s32 %s13, 2
        // Predicated region
        $region37: #{tpu_custom_call.1} parent=35 // pred_check
          %p485 = pneg %p68
        $region38: #{tpu_custom_call.1} parent=35 // pred_check_branch
          %487 = sbr.rel (%p485) target = $region40
        $region39: #{tpu_custom_call.1} parent=35 // pred_region
          %s488 = sand.u32 %s53, 1
          %s489 = scalar_lea.sflag [#allocation4], %s488
          %s490 = sand.u32 %s53, 1
          %s491 = smul.addr %s490, 512
          %s492 = scalar_lea.vmem [#allocation5], %s491
          %493 = dma.done %s489, 8192
        $region40: #{tpu_custom_call.1} parent=35 // pred_fallthru
          _
      $region36: #{tpu_custom_call.1} parent=5 // pred_fallthru
        _
    $region6: #{tpu_custom_call.1} parent=1 // loop_footer
      %s17 = sadd.s32 1, %s13
    $region7: #{tpu_custom_call.1} parent=1 // loop_footer_branch
      %12 = sbr.rel target = $region3
    $region8: #{tpu_custom_call.1} parent=1 // loop_exit
      _
    %494 = vsyncpa [#allocation3], 1
    %s495 = scalar_lea.sflag [#allocation3], 1
    %496 = vsyncpa %s495, 1
    %497 = vsyncpa [#allocation4], 1
    %s498 = scalar_lea.sflag [#allocation4], 1
    %499 = vsyncpa %s498, 1

</llo_original>
